<compile_context>
chip_gen: v6e
topology: v6e:2x2x1
jax: 0.10.0
libtpu: 0.0.40
codegen_flags: <defaults>
</compile_context>

<pallas_src>
import functools

import jax
import jax.numpy as jnp
from jax.experimental import pallas as pl
from jax.experimental.pallas import tpu as pltpu


# --------------------------------------------------------------------------- #
# Kernel
# --------------------------------------------------------------------------- #
def _dilate_kernel(mask_ref, out_ref, *, iter_num, w, img_h):
    """One block of shape (images_per_block * img_h, W); images stacked on rows.

    `w` is a 3x3 nested tuple of Python floats (trace-time constants), so the
    stencil is fully specialized: zero taps are skipped, shared coefficients
    are factored, and no weight memory is ever read in the kernel.
    """
    m = mask_ref[...]
    rows, width = m.shape

    # ---- boundary masks (hoisted: built once per grid step) -----------------
    row = jax.lax.broadcasted_iota(jnp.int32, (rows, width), 0)
    col = jax.lax.broadcasted_iota(jnp.int32, (rows, width), 1)
    if rows == img_h:                       # single image per block
        r_in = row
    elif (img_h & (img_h - 1)) == 0:        # power-of-two H: bitwise AND
        r_in = jnp.bitwise_and(row, img_h - 1)
    else:                                   # one hoisted vector rem
        r_in = row % img_h
    is_top = r_in == 0
    is_bot = r_in == img_h - 1
    is_left = col == 0
    is_right = col == width - 1

    # Edge-replicated neighbor shifts: one XLU roll + one VPU select each.  The
    # selects also repair cross-image contamination at block-internal image
    # boundaries (rolls wrap across the stacked images).
    # TODO(synk): on v7x the two row-fixup selects per iteration could become
    # single-row overwrites through a VMEM scratch (optional review item);
    # skipped here to keep the loop carry a pure value.
    def shift_rows(x, di):
        if di == -1:                        # x[max(i-1, 0), j]
            return jnp.where(is_top, x, pltpu.roll(x, 1, 0))
        if di == 1:                         # x[min(i+1, H-1), j]
            return jnp.where(is_bot, x, pltpu.roll(x, rows - 1, 0))
        return x

    def shift_cols(x, dj):
        if dj == -1:                        # x[i, max(j-1, 0)]
            return jnp.where(is_left, x, pltpu.roll(x, 1, 1))
        if dj == 1:                         # x[i, min(j+1, W-1)]
            return jnp.where(is_right, x, pltpu.roll(x, width - 1, 1))
        return x

    # Group nonzero taps by coefficient at trace time: shared coefficients (the
    # default kernel's four -0.25 cross taps) are summed first, scaled once.
    groups = {}
    for di in range(3):
        for dj in range(3):
            c = w[di][dj]
            if c != 0.0:
                groups.setdefault(c, []).append((di - 1, dj - 1))

    def step(mm):
        cache = {}

        def shifted(di, dj):
            if (di, dj) not in cache:
                cache[(di, dj)] = shift_cols(shift_rows(mm, di), dj)
            return cache[(di, dj)]

        res = None
        for c, offsets in groups.items():
            s = None
            for (di, dj) in offsets:
                v = shifted(di, dj)
                s = v if s is None else s + v
            term = s if c == 1.0 else c * s
            res = term if res is None else res + term
        if res is None:                     # degenerate all-zero weight
            res = jnp.zeros_like(mm)
        # compare + cast (no select): mask <- |res| > 1e-4
        return (jnp.abs(res) > 1e-4).astype(mm.dtype)

    if iter_num <= 4:                       # short counts: full unroll
        for _ in range(iter_num):
            m = step(m)
    else:                                   # long counts: bounded code size,
        m = jax.lax.fori_loop(              # unroll=2 keeps slot packing
            0, iter_num, lambda _, mm: step(mm), m, unroll=2)

    out_ref[...] = m


# --------------------------------------------------------------------------- #
# Block / VMEM planning
# --------------------------------------------------------------------------- #
# Realistic live-set multiplier per block: in/out double buffers (~4x) plus
# iotas, 4 boolean masks and the rolled/accumulated temporaries (~8x).
_LIVE_BLOCKS = 12


@functools.lru_cache(maxsize=1)
def _vmem_plan():
    """Return (vmem_limit_bytes, per_block_byte_budget) sized from the chip."""
    try:
        cap = int(pltpu.get_tpu_info().vmem_capacity_bytes)   # per-core VMEM
    except Exception:
        cap = 64 << 20                                        # v7x-sized fallback
    limit = min(max(cap // 2, 16 << 20), 64 << 20)            # explicit scoped limit
    budget = max(256 << 10, min(limit // _LIVE_BLOCKS, 4 << 20))
    return limit, budget


def _images_per_block(n, h, w, itemsize, block_budget):
    """Number of images stacked into one grid block.

    Constraints: bt divides n; (bt*h) is sublane-aligned (%8 == 0) unless the
    block spans the whole array (full dims are always legal).  Preferences
    (perf review): at least 2 grid steps when n >= 2 so ("parallel",) can use
    both v7x TensorCores -- ideally an even number of steps -- then the largest
    block that fits the VMEM budget.
    """
    legal = [bt for bt in range(1, n + 1)
             if n % bt == 0 and ((bt * h) % 8 == 0 or bt == n)]
    fitting = [bt for bt in legal if bt * h * w * itemsize <= block_budget]
    # If nothing fits the budget (huge single image), take the smallest legal
    # block and rely on the explicit vmem_limit headroom.
    # TODO(synk): for very large single images, tile H with a 1-row replicated
    # halo instead of a whole-image block.
    pool = fitting if fitting else [min(legal)]
    multi = [bt for bt in pool if n // bt >= 2]
    if multi:
        even = [bt for bt in multi if (n // bt) % 2 == 0]
        return max(even) if even else max(multi)
    return max(pool)


# --------------------------------------------------------------------------- #
# Wrapper
# --------------------------------------------------------------------------- #
@functools.partial(jax.jit, static_argnums=(1, 2))
def _dilate_mask_impl(batch_mask, iter_num, w):
    n, c, h, wd = batch_mask.shape
    if c != 1:
        raise ValueError("DilateMask expects a single-channel mask (N,1,H,W)")

    # Zero-copy relayout: (N,1,H,W) -> (N*H, W).  W stays the lane (last) dim;
    # images are stacked along rows.  No wrapper-side transposes, no extra HBM
    # passes, and the block's last dim always equals the full array dim.
    x = batch_mask.reshape(n * h, wd)

    vmem_limit, block_budget = _vmem_plan()
    itemsize = jnp.dtype(batch_mask.dtype).itemsize
    bt = _images_per_block(n, h, wd, itemsize, block_budget)
    block_rows = bt * h
    grid = (n // bt,)

    kernel = functools.partial(_dilate_kernel, iter_num=iter_num, w=w, img_h=h)
    out = pl.pallas_call(
        kernel,
        out_shape=jax.ShapeDtypeStruct((n * h, wd), batch_mask.dtype),
        grid=grid,
        in_specs=[pl.BlockSpec((block_rows, wd), lambda b: (b, 0))],
        out_specs=pl.BlockSpec((block_rows, wd), lambda b: (b, 0)),
        compiler_params=pltpu.CompilerParams(
            dimension_semantics=("parallel",),
            vmem_limit_bytes=vmem_limit),
    )(x)

    return out.reshape(n, 1, h, wd)


# The module's kernel is a fixed, non-trainable constant.
_DEFAULT_WEIGHT = ((0.0, -0.25, 0.0),
                   (-0.25, 1.0, -0.25),
                   (0.0, -0.25, 0.0))

_weight_tuple_cache = {}


def _weight_tuple(weight):
    """3x3 tuple of Python floats; device_get runs at most once per weight."""
    if weight is None:
        return _DEFAULT_WEIGHT
    key = id(weight)
    if key not in _weight_tuple_cache:
        host = jax.device_get(weight).reshape(3, 3)
        _weight_tuple_cache[key] = tuple(tuple(float(v) for v in r) for r in host)
    return _weight_tuple_cache[key]


class DilateMask:
    """JAX/Pallas port of the PyTorch DilateMask module (forward only)."""

    def __init__(self, weight=None):
        self.w = _weight_tuple(weight)      # host-side tuple, computed once

    def __call__(self, batch_mask, iter_num):
        return _dilate_mask_impl(batch_mask, int(iter_num), self.w)


def dilate_mask(batch_mask, iter_num, weight=None):
    """Functional entry point.  batch_mask: (N,1,H,W) float; weight: (1,1,3,3)."""
    return _dilate_mask_impl(batch_mask, int(iter_num), _weight_tuple(weight))


def make_dilate_weight():
    # Deterministic init exactly as in DilateMask.__init__ (shape (1,1,3,3)).
    k = jnp.array(
        [[0.0, -0.25, 0.0],
         [-0.25, 1.0, -0.25],
         [0.0, -0.25, 0.0]], dtype=jnp.float32)
    return k.reshape(1, 1, 3, 3)


def dilate_mask_ref(batch_mask, iter_num, weight):
    """Pure-JAX reference (replication pad + 3x3 conv), for validation.

    Note: for general weights the kernel's grouped accumulation order may
    differ from torch's conv order by f32 rounding; for the module's exact
    quarter weights and {0,1} masks all sums are exact, so bit-exact agreement
    is expected.
    """
    m = batch_mask[:, 0]  # (N, H, W)
    w = weight.reshape(3, 3)
    N, H, W = m.shape
    for _ in range(int(iter_num)):
        p = jnp.pad(m, ((0, 0), (1, 1), (1, 1)), mode="edge")
        res = jnp.zeros_like(m)
        for di in range(3):
            for dj in range(3):
                res = res + w[di, dj] * p[:, di:di + H, dj:dj + W]
        m = jnp.where(jnp.abs(res) > 1e-4, 1.0, 0.0).astype(m.dtype)
    return m[:, None, :, :]


if __name__ == "__main__":
    key = jax.random.PRNGKey(0)
    weight = make_dilate_weight()
    module = DilateMask()

    # Case 1: module-default small shapes, Python-unrolled iteration path.
    N, C, H, W = 2, 1, 16, 16
    iter_num = 3
    batch_mask = (jax.random.uniform(key, (N, C, H, W)) > 0.6).astype(jnp.float32)
    out = jax.block_until_ready(module(batch_mask, iter_num))
    ref = dilate_mask_ref(batch_mask, iter_num, weight)
    assert out.shape == batch_mask.shape
    assert out.dtype == batch_mask.dtype
    assert bool(jnp.all(out == ref)), "Pallas output mismatch vs JAX reference (case 1)"

    # Case 2: multiple images per block + fori_loop(unroll=2) path.
    key2 = jax.random.PRNGKey(0)
    N2, H2, W2, iters2 = 4, 16, 16, 6
    batch_mask2 = (jax.random.uniform(key2, (N2, 1, H2, W2)) > 0.5).astype(jnp.float32)
    out2 = jax.block_until_ready(dilate_mask(batch_mask2, iters2, weight))
    ref2 = dilate_mask_ref(batch_mask2, iters2, weight)
    assert out2.shape == batch_mask2.shape
    assert bool(jnp.all(out2 == ref2)), "Pallas output mismatch vs JAX reference (case 2)"

    print("KERNEL_OK")
</pallas_src>

<mosaic_0001>
module attributes {stable_mosaic.version = 11 : i64} {
  func.func @_dilate_kernel(%arg0: i32, %arg1: memref<16x16xf32, #tpu.memory_space<vmem>>, %arg2: memref<16x16xf32, #tpu.memory_space<vmem>>) attributes {dimension_semantics = [#tpu.dimension_semantics<parallel>], iteration_bounds = array<i64: 2>, scalar_prefetch = 0 : i64, scratch_operands = 0 : i64, tpu.core_type = #tpu.core_type<tc>, window_params = [{transform_indices = @transform_0, window_bounds = array<i64: 16, 16>}, {transform_indices = @transform_1, window_bounds = array<i64: 16, 16>}]} {
    %c0 = arith.constant 0 : index
    %c0_0 = arith.constant 0 : index
    %0 = vector.load %arg1[%c0, %c0_0] : memref<16x16xf32, #tpu.memory_space<vmem>>, vector<16x16xf32>
    %1 = tpu.iota {dimensions = array<i32: 0>} : vector<16x16xi32>
    %2 = tpu.iota {dimensions = array<i32: 1>} : vector<16x16xi32>
    %c0_i32 = arith.constant 0 : i32
    %3 = vector.broadcast %c0_i32 : i32 to vector<16x16xi32>
    %4 = arith.cmpi eq, %1, %3 : vector<16x16xi32>
    %c15_i32 = arith.constant 15 : i32
    %5 = vector.broadcast %c15_i32 : i32 to vector<16x16xi32>
    %6 = arith.cmpi eq, %1, %5 : vector<16x16xi32>
    %c0_i32_1 = arith.constant 0 : i32
    %7 = vector.broadcast %c0_i32_1 : i32 to vector<16x16xi32>
    %8 = arith.cmpi eq, %2, %7 : vector<16x16xi32>
    %c15_i32_2 = arith.constant 15 : i32
    %9 = vector.broadcast %c15_i32_2 : i32 to vector<16x16xi32>
    %10 = arith.cmpi eq, %2, %9 : vector<16x16xi32>
    %c1_i32 = arith.constant 1 : i32
    %11 = tpu.dynamic_rotate %0 by %c1_i32 dim 0 : vector<16x16xf32>, i32 -> vector<16x16xf32>
    %12 = arith.select %4, %0, %11 : vector<16x16xi1>, vector<16x16xf32>
    %c1_i32_3 = arith.constant 1 : i32
    %13 = tpu.dynamic_rotate %0 by %c1_i32_3 dim 1 : vector<16x16xf32>, i32 -> vector<16x16xf32>
    %14 = arith.select %8, %0, %13 : vector<16x16xi1>, vector<16x16xf32>
    %15 = arith.addf %12, %14 : vector<16x16xf32>
    %c15_i32_4 = arith.constant 15 : i32
    %16 = tpu.dynamic_rotate %0 by %c15_i32_4 dim 1 : vector<16x16xf32>, i32 -> vector<16x16xf32>
    %17 = arith.select %10, %0, %16 : vector<16x16xi1>, vector<16x16xf32>
    %18 = arith.addf %15, %17 : vector<16x16xf32>
    %c15_i32_5 = arith.constant 15 : i32
    %19 = tpu.dynamic_rotate %0 by %c15_i32_5 dim 0 : vector<16x16xf32>, i32 -> vector<16x16xf32>
    %20 = arith.select %6, %0, %19 : vector<16x16xi1>, vector<16x16xf32>
    %21 = arith.addf %18, %20 : vector<16x16xf32>
    %cst = arith.constant -2.500000e-01 : f32
    %22 = vector.broadcast %cst : f32 to vector<16x16xf32>
    %23 = arith.mulf %22, %21 : vector<16x16xf32>
    %24 = arith.addf %23, %0 : vector<16x16xf32>
    %25 = math.absf %24 : vector<16x16xf32>
    %cst_6 = arith.constant 9.99999974E-5 : f32
    %26 = vector.broadcast %cst_6 : f32 to vector<16x16xf32>
    %27 = arith.cmpf ogt, %25, %26 : vector<16x16xf32>
    %28 = arith.extui %27 : vector<16x16xi1> to vector<16x16xi32>
    %29 = arith.sitofp %28 : vector<16x16xi32> to vector<16x16xf32>
    %c1_i32_7 = arith.constant 1 : i32
    %30 = tpu.dynamic_rotate %29 by %c1_i32_7 dim 0 : vector<16x16xf32>, i32 -> vector<16x16xf32>
    %31 = arith.select %4, %29, %30 : vector<16x16xi1>, vector<16x16xf32>
    %c1_i32_8 = arith.constant 1 : i32
    %32 = tpu.dynamic_rotate %29 by %c1_i32_8 dim 1 : vector<16x16xf32>, i32 -> vector<16x16xf32>
    %33 = arith.select %8, %29, %32 : vector<16x16xi1>, vector<16x16xf32>
    %34 = arith.addf %31, %33 : vector<16x16xf32>
    %c15_i32_9 = arith.constant 15 : i32
    %35 = tpu.dynamic_rotate %29 by %c15_i32_9 dim 1 : vector<16x16xf32>, i32 -> vector<16x16xf32>
    %36 = arith.select %10, %29, %35 : vector<16x16xi1>, vector<16x16xf32>
    %37 = arith.addf %34, %36 : vector<16x16xf32>
    %c15_i32_10 = arith.constant 15 : i32
    %38 = tpu.dynamic_rotate %29 by %c15_i32_10 dim 0 : vector<16x16xf32>, i32 -> vector<16x16xf32>
    %39 = arith.select %6, %29, %38 : vector<16x16xi1>, vector<16x16xf32>
    %40 = arith.addf %37, %39 : vector<16x16xf32>
    %cst_11 = arith.constant -2.500000e-01 : f32
    %41 = vector.broadcast %cst_11 : f32 to vector<16x16xf32>
    %42 = arith.mulf %41, %40 : vector<16x16xf32>
    %43 = arith.addf %42, %29 : vector<16x16xf32>
    %44 = math.absf %43 : vector<16x16xf32>
    %cst_12 = arith.constant 9.99999974E-5 : f32
    %45 = vector.broadcast %cst_12 : f32 to vector<16x16xf32>
    %46 = arith.cmpf ogt, %44, %45 : vector<16x16xf32>
    %47 = arith.extui %46 : vector<16x16xi1> to vector<16x16xi32>
    %48 = arith.sitofp %47 : vector<16x16xi32> to vector<16x16xf32>
    %c1_i32_13 = arith.constant 1 : i32
    %49 = tpu.dynamic_rotate %48 by %c1_i32_13 dim 0 : vector<16x16xf32>, i32 -> vector<16x16xf32>
    %50 = arith.select %4, %48, %49 : vector<16x16xi1>, vector<16x16xf32>
    %c1_i32_14 = arith.constant 1 : i32
    %51 = tpu.dynamic_rotate %48 by %c1_i32_14 dim 1 : vector<16x16xf32>, i32 -> vector<16x16xf32>
    %52 = arith.select %8, %48, %51 : vector<16x16xi1>, vector<16x16xf32>
    %53 = arith.addf %50, %52 : vector<16x16xf32>
    %c15_i32_15 = arith.constant 15 : i32
    %54 = tpu.dynamic_rotate %48 by %c15_i32_15 dim 1 : vector<16x16xf32>, i32 -> vector<16x16xf32>
    %55 = arith.select %10, %48, %54 : vector<16x16xi1>, vector<16x16xf32>
    %56 = arith.addf %53, %55 : vector<16x16xf32>
    %c15_i32_16 = arith.constant 15 : i32
    %57 = tpu.dynamic_rotate %48 by %c15_i32_16 dim 0 : vector<16x16xf32>, i32 -> vector<16x16xf32>
    %58 = arith.select %6, %48, %57 : vector<16x16xi1>, vector<16x16xf32>
    %59 = arith.addf %56, %58 : vector<16x16xf32>
    %cst_17 = arith.constant -2.500000e-01 : f32
    %60 = vector.broadcast %cst_17 : f32 to vector<16x16xf32>
    %61 = arith.mulf %60, %59 : vector<16x16xf32>
    %62 = arith.addf %61, %48 : vector<16x16xf32>
    %63 = math.absf %62 : vector<16x16xf32>
    %cst_18 = arith.constant 9.99999974E-5 : f32
    %64 = vector.broadcast %cst_18 : f32 to vector<16x16xf32>
    %65 = arith.cmpf ogt, %63, %64 : vector<16x16xf32>
    %66 = arith.extui %65 : vector<16x16xi1> to vector<16x16xi32>
    %67 = arith.sitofp %66 : vector<16x16xi32> to vector<16x16xf32>
    %c0_19 = arith.constant 0 : index
    %c0_20 = arith.constant 0 : index
    %68 = vector.load %arg2[%c0_19, %c0_20] : memref<16x16xf32, #tpu.memory_space<vmem>>, vector<16x16xf32>
    tpu.vector_store %arg2[%c0_19, %c0_20], %67 {strides = array<i32>} : memref<16x16xf32, #tpu.memory_space<vmem>>, vector<16x16xf32>,
    return
  }
  func.func @transform_0(%arg0: i32) -> (i32, i32) {
    %c0_i32 = arith.constant 0 : i32
    %c0_i32_0 = arith.constant 0 : i32
    return %arg0, %c0_i32 : i32, i32
  }
  func.func @transform_1(%arg0: i32) -> (i32, i32) {
    %c0_i32 = arith.constant 0 : i32
    %c0_i32_0 = arith.constant 0 : i32
    return %arg0, %c0_i32 : i32, i32
  }
}

</mosaic_0001>

<llo_original>
// kernel: _dilate_mask_impl.1
$region0: #{_dilate_mask_impl.1}
  #allocation0 [shape = 'u32[]', space=smem, size = 0x4, offset = 0x4, fixed_abs, tag = 'smem constant byte address 0x4 - core index']
  #allocation1 [shape = 'u32[144,128]{1,0:T(1,128)}', space=vmem, size = 0x12000, scoped, tag = 'internal scratch']
  %s0 = inlined_call_operand.hbm [shape: f32[32,16], index: 0, kind: input, shape index: {}]
  %s1 = inlined_call_operand.hbm [shape: f32[32,16], index: 1, kind: output, shape index: {}]
  %s2 = sld [smem:[#allocation0]]
  $region41: #{_dilate_mask_impl.1} parent=0
    _
  %s4 = ssub.s32 1, %s2
  %s5 = scalar_select 0, %s4, %s2
  $region1: #{_dilate_mask_impl.1} parent=0
    #allocation2 [shape = 'u8[16384]{0}', space=vmem, size = 0x4000, scoped, tag = 'input window, operand 0']
    #allocation3 [shape = 's32[2]{0}', space=sflag, size = 0x8, scoped, tag = 'scoped memory for _dilate_mask_impl.1']
    #allocation4 [shape = 's32[2]{0}', space=sflag, size = 0x8, scoped, tag = 'scoped memory for _dilate_mask_impl.1']
    #allocation5 [shape = 'u8[16384]{0}', space=vmem, size = 0x4000, scoped, tag = 'output window, operand 0']
    %6 = vsyncpa [#allocation3], 0
    %s7 = scalar_lea.sflag [#allocation3], 1
    %8 = vsyncpa %s7, 0
    %9 = vsyncpa [#allocation4], 0
    %s10 = scalar_lea.sflag [#allocation4], 1
    %11 = vsyncpa %s10, 0
    loop: start=0, step=1, limit=4
    $region2: #{_dilate_mask_impl.1} parent=1 // loop_pre_header
      _
    $region3: #{_dilate_mask_impl.1} parent=1 // loop_header
      %s13 = sphi 0, %s17
      %p14 = scmp.ge.s32.totalorder %s13, 4
      %s23 = sphi 0, %s25
      %s26 = sphi 0, %s23
      %s27 = sphi 0, %s26
      %s43 = sphi 0, %s27
      %s49 = sphi 0, %s51
      %s52 = sphi 0, %s49
      %s53 = sphi 0, %s52
      %s69 = sphi 0, %s53
    $region4: #{_dilate_mask_impl.1} parent=1 // loop_header_branch
      %16 = sbr.rel (%p14) target = $region8
    $region5: #{_dilate_mask_impl.1} parent=1 // loop_body
      %s18 = ssub.s32 %s13, 1
      %s19 = ssub.s32 %s13, 2
      %s20 = sadd.s32 %s13, 1
      %s21 = ssub.s32 %s13, %s20
      %p22 = scmp.eq.s32.totalorder %s21, 0
      %s24 = sadd.s32 %s23, 1
      %s25 = scalar_select %p22, %s23, %s24
      %p28 = pneg %p22
      %p29 = scmp.eq.s32.totalorder %s13, 1
      %p30 = por %p28, %p29
      %p31 = scmp.ne.s32.totalorder %s23, %s26
      %p32 = scmp.eq.s32.totalorder %s13, 0
      %p33 = por %p31, %p32
      %p34 = scmp.ne.s32.totalorder %s23, %s26
      %p35 = scmp.eq.s32.totalorder %s18, 1
      %p36 = por %p34, %p35
      %p37 = scmp.ne.s32.totalorder %s26, %s27
      %p38 = scmp.eq.s32.totalorder %s18, 0
      %p39 = por %p37, %p38
      %p40 = scmp.ne.s32.totalorder %s26, %s27
      %p41 = scmp.eq.s32.totalorder %s19, 1
      %p42 = por %p40, %p41
      %p44 = scmp.ne.s32.totalorder %s27, %s43
      %p45 = scmp.eq.s32.totalorder %s19, 0
      %p46 = por %p44, %p45
      %s47 = ssub.s32 %s13, %s20
      %p48 = scmp.eq.s32.totalorder %s47, 0
      %s50 = sadd.s32 %s49, 1
      %s51 = scalar_select %p48, %s49, %s50
      %p54 = pneg %p48
      %p55 = scmp.eq.s32.totalorder %s13, 1
      %p56 = por %p54, %p55
      %p57 = scmp.ne.s32.totalorder %s49, %s52
      %p58 = scmp.eq.s32.totalorder %s13, 0
      %p59 = por %p57, %p58
      %p60 = scmp.ne.s32.totalorder %s49, %s52
      %p61 = scmp.eq.s32.totalorder %s18, 1
      %p62 = por %p60, %p61
      %p63 = scmp.ne.s32.totalorder %s52, %s53
      %p64 = scmp.eq.s32.totalorder %s18, 0
      %p65 = por %p63, %p64
      %p66 = scmp.ne.s32.totalorder %s52, %s53
      %p67 = scmp.eq.s32.totalorder %s19, 1
      %p68 = por %p66, %p67
      %p70 = scmp.ne.s32.totalorder %s53, %s69
      %p71 = scmp.eq.s32.totalorder %s19, 0
      %p72 = por %p70, %p71
      %p73 = scmp.le.s32.totalorder 1, %s13
      %p74 = scmp.lt.s32.totalorder %s13, 3
      %p75 = pnand %p73, %p74
      %p76 = pneg %p75
      // Predicated region
      $region9: #{_dilate_mask_impl.1} parent=5 // pred_check
        _
      $region10: #{_dilate_mask_impl.1} parent=5 // pred_check_branch
        %78 = sbr.rel (%p75) target = $region12
      $region11: #{_dilate_mask_impl.1} parent=5 // pred_region
        %s79 = ssub.s32 %s13, 1
      $region12: #{_dilate_mask_impl.1} parent=5 // pred_fallthru
        _
      %p80 = scmp.lt.s32.totalorder %s13, 2
      // Predicated region
      $region13: #{_dilate_mask_impl.1} parent=5 // pred_check
        %p81 = pneg %p80
      $region14: #{_dilate_mask_impl.1} parent=5 // pred_check_branch
        %83 = sbr.rel (%p81) target = $region16
      $region15: #{_dilate_mask_impl.1} parent=5 // pred_region
        // Predicated region
        $region17: #{_dilate_mask_impl.1} parent=15 // pred_check
          %p84 = pneg %p33
        $region18: #{_dilate_mask_impl.1} parent=15 // pred_check_branch
          %86 = sbr.rel (%p84) target = $region20
        $region19: #{_dilate_mask_impl.1} parent=15 // pred_region
          %s87 = sand.u32 %s23, 1
          %s88 = scalar_lea.sflag [#allocation3], %s87
          %s89 = sand.u32 %s23, 1
          %s90 = smul.addr %s89, 16
          %s91 = scalar_lea.vmem [#allocation2], %s90
          %s92 = smul.u32 2, %s13
          %s94 = ssub.s32 256, 256
          %95 = vsyncadd %s88, %s94
          %s96 = smul.addr %s92, 128
          %s97 = scalar_lea.hbm %s0, %s96
          %s98 = sshll.u32 %s91, 4
          %s99 = int_to_ptr.vmem [resolvable:$true] %s98
          %104 = dma.hbm_to_vmem [thread:$0]  %s97, 256, %s99, %s88, 128, 128, 8
        $region20: #{_dilate_mask_impl.1} parent=15 // pred_fallthru
          _
      $region16: #{_dilate_mask_impl.1} parent=5 // pred_fallthru
        _
      %p105 = scmp.le.s32.totalorder 1, %s13
      %p106 = scmp.lt.s32.totalorder %s13, 3
      %p107 = pnand %p105, %p106
      %p108 = pneg %p107
      // Predicated region
      $region21: #{_dilate_mask_impl.1} parent=5 // pred_check
        _
      $region22: #{_dilate_mask_impl.1} parent=5 // pred_check_branch
        %110 = sbr.rel (%p107) target = $region24
      $region23: #{_dilate_mask_impl.1} parent=5 // pred_region
        %s111 = ssub.s32 %s13, 1
        %s112 = sand.u32 %s26, 1
        %s113 = scalar_lea.sflag [#allocation3], %s112
        %s114 = sand.u32 %s26, 1
        %s115 = smul.addr %s114, 16
        %s116 = scalar_lea.vmem [#allocation2], %s115
        // Predicated region
        $region25: #{_dilate_mask_impl.1} parent=23 // pred_check
          %p117 = pneg %p39
        $region26: #{_dilate_mask_impl.1} parent=23 // pred_check_branch
          %119 = sbr.rel (%p117) target = $region28
        $region27: #{_dilate_mask_impl.1} parent=23 // pred_region
          %120 = dma.done %s113, 256
        $region28: #{_dilate_mask_impl.1} parent=23 // pred_fallthru
          _
        %s121 = sand.u32 %s26, 1
        %s122 = scalar_lea.sflag [#allocation3], %s121
        %s123 = sand.u32 %s26, 1
        %s124 = smul.addr %s123, 16
        %s125 = scalar_lea.vmem [#allocation2], %s124
        %p126 = pneg %p39
        %p127 = pneg %p36
        %p128 = pneg %p65
        %p129 = pneg %p62
        %s130 = sand.u32 %s52, 1
        %s131 = scalar_lea.sflag [#allocation4], %s130
        %s132 = sand.u32 %s52, 1
        %s133 = smul.addr %s132, 16
        %s134 = scalar_lea.vmem [#allocation5], %s133
        %s135 = smul.u32 2, %s18
        %s136 = smul.u32 2, %s18
        %v137 = vld [vmem:[%s116] sm:$0xff]
        %v138 = vld [vmem:[%s116 + $0x8] sm:$0xff]
        %v139 = vlaneseq
        %v140 = vshrl.u32 %v139, 7
        %v141 = vadd.s32 %v140, 8
        %v142 = vlaneseq
        %v143 = vand.u32 %v142, 127
        %vm144 = vcmp.eq.s32.totalorder %v140, 0
        %vm145 = vcmp.eq.s32.totalorder %v141, 0
        %vm146 = vcmp.eq.s32.totalorder %v140, 15
        %vm147 = vcmp.eq.s32.totalorder %v141, 15
        %vm148 = vcmp.eq.s32.totalorder %v143, 0
        %vm149 = vcmp.eq.s32.totalorder %v143, 15
        %v150 = vrot.slane %v137, 7
        %v151 = vrot.slane %v138, 7
        %vm152 = vcmp.lt.s32.totalorder %v140, 1
        %v153 = vsel %vm152, %v150, %v151
        %v154 = vsel %vm152, %v151, %v150
        %v155 = vsel %vm144, %v137, %v154
        %v156 = vsel %vm145, %v138, %v153
        %vm157 = vcmask 1047680
        %158 = vrot.lane.b32.xlu0 %v137, 16
        %v159 = vpop.permute.xlu0 %158
        %v160 = vsel %vm157, %v159, %v137
        %161 = vrot.lane.b32.xlu0 %v138, 16
        %v162 = vpop.permute.xlu0 %161
        %v163 = vsel %vm157, %v162, %v138
        %164 = vrot.lane.b32.xlu0 %v160, 16
        %v165 = vpop.permute.xlu0 %164
        %166 = vrot.lane.b32.xlu0 %v163, 16
        %v167 = vpop.permute.xlu0 %166
        %v168 = vsel %vm157, %v165, %v137
        %v169 = vsel %vm157, %v167, %v138
        %172 = vrot.lane.b32.xlu0 %v168, 113
        %v173 = vpop.permute.xlu0 %172
        %174 = vrot.lane.b32.xlu0 %v169, 113
        %v175 = vpop.permute.xlu0 %174
        %v178 = vsel %vm148, %v137, %v173
        %v179 = vsel %vm148, %v138, %v175
        %v180 = vadd.f32 %v155, %v178
        %v181 = vadd.f32 %v156, %v179
        %182 = vrot.lane.b32.xlu0 %v168, 127
        %v183 = vpop.permute.xlu0 %182
        %184 = vrot.lane.b32.xlu0 %v169, 127
        %v185 = vpop.permute.xlu0 %184
        %v188 = vsel %vm149, %v137, %v183
        %v189 = vsel %vm149, %v138, %v185
        %v190 = vadd.f32 %v180, %v188
        %v191 = vadd.f32 %v181, %v189
        %v192 = vrot.slane %v137, 1
        %v193 = vrot.slane %v138, 1
        %vm194 = vcmp.lt.s32.totalorder %v140, 7
        %v195 = vsel %vm194, %v192, %v193
        %v196 = vsel %vm194, %v193, %v192
        %v197 = vsel %vm146, %v137, %v195
        %v198 = vsel %vm147, %v138, %v196
        %v199 = vadd.f32 %v190, %v197
        %v200 = vadd.f32 %v191, %v198
        %v201 = vmul.f32 %v199, -0.25
        %v202 = vmul.f32 %v200, -0.25
        %v203 = vadd.f32 %v201, %v137
        %v204 = vadd.f32 %v202, %v138
        %v205 = vand.u32 2147483647, %v203
        %v206 = vand.u32 2147483647, %v204
        %vm207 = vcmp.gt.f32.partialorder %v205, 0.0001
        %vm208 = vcmp.gt.f32.partialorder %v206, 0.0001
        %v209 = vsel %vm207, 1, 0
        %v210 = vsel %vm208, 1, 0
        %v211 = vcvt.s32.f32 %v209
        %v212 = vcvt.s32.f32 %v210
        %v213 = vrot.slane %v211, 7
        %v214 = vrot.slane %v212, 7
        %v215 = vsel %vm152, %v213, %v214
        %v216 = vsel %vm152, %v214, %v213
        %v217 = vsel %vm144, %v211, %v216
        %v218 = vsel %vm145, %v212, %v215
        %219 = vrot.lane.b32.xlu0 %v211, 16
        %v220 = vpop.permute.xlu0 %219
        %v221 = vsel %vm157, %v220, %v211
        %222 = vrot.lane.b32.xlu0 %v212, 16
        %v223 = vpop.permute.xlu0 %222
        %v224 = vsel %vm157, %v223, %v212
        %225 = vrot.lane.b32.xlu0 %v221, 16
        %v226 = vpop.permute.xlu0 %225
        %227 = vrot.lane.b32.xlu0 %v224, 16
        %v228 = vpop.permute.xlu0 %227
        %v229 = vsel %vm157, %v226, %v211
        %v230 = vsel %vm157, %v228, %v212
        %233 = vrot.lane.b32.xlu0 %v229, 113
        %v234 = vpop.permute.xlu0 %233
        %235 = vrot.lane.b32.xlu0 %v230, 113
        %v236 = vpop.permute.xlu0 %235
        %v239 = vsel %vm148, %v211, %v234
        %v240 = vsel %vm148, %v212, %v236
        %v241 = vadd.f32 %v217, %v239
        %v242 = vadd.f32 %v218, %v240
        %243 = vrot.lane.b32.xlu0 %v229, 127
        %v244 = vpop.permute.xlu0 %243
        %245 = vrot.lane.b32.xlu0 %v230, 127
        %v246 = vpop.permute.xlu0 %245
        %v249 = vsel %vm149, %v211, %v244
        %v250 = vsel %vm149, %v212, %v246
        %v251 = vadd.f32 %v241, %v249
        %v252 = vadd.f32 %v242, %v250
        %v253 = vrot.slane %v211, 1
        %v254 = vrot.slane %v212, 1
        %v255 = vsel %vm194, %v253, %v254
        %v256 = vsel %vm194, %v254, %v253
        %v257 = vsel %vm146, %v211, %v255
        %v258 = vsel %vm147, %v212, %v256
        %v259 = vadd.f32 %v251, %v257
        %v260 = vadd.f32 %v252, %v258
        %v261 = vmul.f32 %v259, -0.25
        %v262 = vmul.f32 %v260, -0.25
        %v263 = vadd.f32 %v261, %v211
        %v264 = vadd.f32 %v262, %v212
        %v265 = vand.u32 2147483647, %v263
        %v266 = vand.u32 2147483647, %v264
        %vm267 = vcmp.gt.f32.partialorder %v265, 0.0001
        %vm268 = vcmp.gt.f32.partialorder %v266, 0.0001
        %v269 = vsel %vm267, 1, 0
        %v270 = vsel %vm268, 1, 0
        %v271 = vcvt.s32.f32 %v269
        %v272 = vcvt.s32.f32 %v270
        %v273 = vrot.slane %v271, 7
        %v274 = vrot.slane %v272, 7
        %v275 = vsel %vm152, %v273, %v274
        %v276 = vsel %vm152, %v274, %v273
        %v277 = vsel %vm144, %v271, %v276
        %v278 = vsel %vm145, %v272, %v275
        %279 = vrot.lane.b32.xlu0 %v271, 16
        %v280 = vpop.permute.xlu0 %279
        %v281 = vsel %vm157, %v280, %v271
        %282 = vrot.lane.b32.xlu0 %v272, 16
        %v283 = vpop.permute.xlu0 %282
        %v284 = vsel %vm157, %v283, %v272
        %285 = vrot.lane.b32.xlu0 %v281, 16
        %v286 = vpop.permute.xlu0 %285
        %287 = vrot.lane.b32.xlu0 %v284, 16
        %v288 = vpop.permute.xlu0 %287
        %v289 = vsel %vm157, %v286, %v271
        %v290 = vsel %vm157, %v288, %v272
        %293 = vrot.lane.b32.xlu0 %v289, 113
        %v294 = vpop.permute.xlu0 %293
        %295 = vrot.lane.b32.xlu0 %v290, 113
        %v296 = vpop.permute.xlu0 %295
        %v299 = vsel %vm148, %v271, %v294
        %v300 = vsel %vm148, %v272, %v296
        %v301 = vadd.f32 %v277, %v299
        %v302 = vadd.f32 %v278, %v300
        %303 = vrot.lane.b32.xlu0 %v289, 127
        %v304 = vpop.permute.xlu0 %303
        %305 = vrot.lane.b32.xlu0 %v290, 127
        %v306 = vpop.permute.xlu0 %305
        %v309 = vsel %vm149, %v271, %v304
        %v310 = vsel %vm149, %v272, %v306
        %v311 = vadd.f32 %v301, %v309
        %v312 = vadd.f32 %v302, %v310
        %v313 = vrot.slane %v271, 1
        %v314 = vrot.slane %v272, 1
        %v315 = vsel %vm194, %v313, %v314
        %v316 = vsel %vm194, %v314, %v313
        %v317 = vsel %vm146, %v271, %v315
        %v318 = vsel %vm147, %v272, %v316
        %v319 = vadd.f32 %v311, %v317
        %v320 = vadd.f32 %v312, %v318
        %v321 = vmul.f32 %v319, -0.25
        %v322 = vmul.f32 %v320, -0.25
        %v323 = vadd.f32 %v321, %v271
        %v324 = vadd.f32 %v322, %v272
        %v325 = vand.u32 2147483647, %v323
        %v326 = vand.u32 2147483647, %v324
        %vm327 = vcmp.gt.f32.partialorder %v325, 0.0001
        %vm328 = vcmp.gt.f32.partialorder %v326, 0.0001
        %v329 = vsel %vm327, 1, 0
        %v330 = vsel %vm328, 1, 0
        %v331 = vcvt.s32.f32 %v329
        %v332 = vcvt.s32.f32 %v330
        %vm333 = vcmask 130048
        %334 = vst.msk [vmem:[%s134] sm:$0xff] %vm333, %v331
        %335 = vst.msk [vmem:[%s134 + $0x8] sm:$0xff] %vm333, %v332
        %s336 = sand.u32 %s52, 1
        %s337 = scalar_lea.sflag [#allocation4], %s336
        %s338 = sand.u32 %s52, 1
        %s339 = smul.addr %s338, 16
        %s340 = scalar_lea.vmem [#allocation5], %s339
        // Predicated region
        $region29: #{_dilate_mask_impl.1} parent=23 // pred_check
          %p341 = pneg %p62
        $region30: #{_dilate_mask_impl.1} parent=23 // pred_check_branch
          %343 = sbr.rel (%p341) target = $region32
        $region31: #{_dilate_mask_impl.1} parent=23 // pred_region
          %s344 = smul.u32 2, %s18
          %s346 = ssub.s32 256, 256
          %347 = vsyncadd %s337, %s346
          %s348 = smul.addr %s344, 128
          %s349 = scalar_lea.hbm %s1, %s348
          %s350 = sshll.u32 %s340, 4
          %s351 = int_to_ptr.vmem [resolvable:$true] %s350
          %356 = dma.vmem_to_hbm [thread:$0]  %s351, 256, %s349, %s337, 128, 128, 8
        $region32: #{_dilate_mask_impl.1} parent=23 // pred_fallthru
          _
      $region24: #{_dilate_mask_impl.1} parent=5 // pred_fallthru
        _
      %p357 = scmp.le.s32.totalorder 2, %s13
      // Predicated region
      $region33: #{_dilate_mask_impl.1} parent=5 // pred_check
        %p358 = pneg %p357
      $region34: #{_dilate_mask_impl.1} parent=5 // pred_check_branch
        %360 = sbr.rel (%p358) target = $region36
      $region35: #{_dilate_mask_impl.1} parent=5 // pred_region
        %s361 = ssub.s32 %s13, 2
        // Predicated region
        $region37: #{_dilate_mask_impl.1} parent=35 // pred_check
          %p362 = pneg %p68
        $region38: #{_dilate_mask_impl.1} parent=35 // pred_check_branch
          %364 = sbr.rel (%p362) target = $region40
        $region39: #{_dilate_mask_impl.1} parent=35 // pred_region
          %s365 = sand.u32 %s53, 1
          %s366 = scalar_lea.sflag [#allocation4], %s365
          %s367 = sand.u32 %s53, 1
          %s368 = smul.addr %s367, 16
          %s369 = scalar_lea.vmem [#allocation5], %s368
          %370 = dma.done %s366, 256
        $region40: #{_dilate_mask_impl.1} parent=35 // pred_fallthru
          _
      $region36: #{_dilate_mask_impl.1} parent=5 // pred_fallthru
        _
    $region6: #{_dilate_mask_impl.1} parent=1 // loop_footer
      %s17 = sadd.s32 1, %s13
    $region7: #{_dilate_mask_impl.1} parent=1 // loop_footer_branch
      %12 = sbr.rel target = $region3
    $region8: #{_dilate_mask_impl.1} parent=1 // loop_exit
      _
    %371 = vsyncpa [#allocation3], 1
    %s372 = scalar_lea.sflag [#allocation3], 1
    %373 = vsyncpa %s372, 1
    %374 = vsyncpa [#allocation4], 1
    %s375 = scalar_lea.sflag [#allocation4], 1
    %376 = vsyncpa %s375, 1

</llo_original>
